<compile_context>
chip_gen: v7x
topology: tpu7x:2x2x1
jax: 0.10.0
libtpu: 0.0.40
codegen_flags: <defaults>
</compile_context>

<pallas_src>
import math
import functools

import jax
import jax.numpy as jnp
from jax.experimental import pallas as pl
from jax.experimental.pallas import tpu as pltpu


def _round_up(x: int, m: int) -> int:
    return (x + m - 1) // m * m


def _pick_tile(dim: int, tile: int, align: int) -> int:
    """Largest tile <= requested that still covers `dim`, aligned to `align`."""
    return min(_round_up(tile, align), _round_up(dim, align))


# ---------------------------------------------------------------------------
# Kernel
# ---------------------------------------------------------------------------
def noisy_linear_kernel(x_ref, wmu_ref, wsig_ref, ein_ref, beff_ref, o_ref):
    """One (i, j, k) grid step of  y = x @ (Wmu^T + (Wsig^T * eps_out) * eps_in) + b_eff.

    The f32 output block is the accumulator: its BlockSpec index map does not
    depend on k, so it stays resident in VMEM across the whole reduction axis.
    """
    k = pl.program_id(2)

    @pl.when(k == 0)
    def _():
        # Initialize the resident output block with the effective bias (broadcast
        # of the (1, tn) row over the tm sublanes).
        o_ref[...] = jnp.zeros_like(o_ref) + beff_ref[...]

    # Factorized noise reconstructed on the fly; eps_out is already folded into
    # wsig at prep time, so this is a single sublane-broadcast multiply + add.
    w = wmu_ref[...] + wsig_ref[...] * ein_ref[...]

    # (tm, tk) @ (tk, tn) on the MXU, f32 accumulation directly into the output.
    o_ref[...] += jnp.dot(x_ref[...], w, preferred_element_type=jnp.float32)


# ---------------------------------------------------------------------------
# One-time parameter/layout preparation (run at init / reset_noise time).
# ---------------------------------------------------------------------------
def prepare_noisy_linear_params(weight_mu, weight_sigma, eps_in, eps_out,
                                bias_mu, bias_sigma, *, tn: int = 512,
                                tk: int = 512, compute_dtype=jnp.bfloat16):
    """Transpose / fold / cast / pad the NoisyLinear parameters ONCE.

    Returns (arrays, static) where
      arrays = (wmu_t, wsig_eout_t, eps_in_col, b_eff_row)  # padded, compute dtype
      static = dict(K=..., N=..., tk=..., tn=...)           # pass to the forward
    """
    N, K = weight_mu.shape

    tk = _pick_tile(K, tk, 128)
    tn = _pick_tile(N, tn, 128)
    # Keep >= 2 programs on the (parallel) out_features axis whenever N allows it,
    # so both of v7x's TensorCores have work even at single-i-tile batch sizes.
    if _round_up(N, 128) >= 2 * 128:
        tn = min(tn, _round_up((N + 1) // 2, 128))

    K_pad = _round_up(K, tk)
    N_pad = _round_up(N, tn)

    # (K, N) orientation: contraction lands on the RHS sublane axis and the
    # output is lane-dense in out_features (unmasked vst, no per-tile transpose).
    wmu_t = weight_mu.T.astype(compute_dtype)
    # Fold eps_out into sigma once here -> kernel only needs the eps_in column.
    wsig_eout_t = (weight_sigma.T * eps_out[None, :]).astype(compute_dtype)
    eps_in_col = eps_in.reshape(K, 1).astype(compute_dtype)
    b_eff_row = (bias_mu + bias_sigma * eps_out).astype(jnp.float32).reshape(1, N)

    def pad2(a, rows, cols):
        if a.shape == (rows, cols):     # static guard: aligned shapes skip the copy
            return a
        return jnp.pad(a, ((0, rows - a.shape[0]), (0, cols - a.shape[1])))

    arrays = (
        pad2(wmu_t, K_pad, N_pad),
        pad2(wsig_eout_t, K_pad, N_pad),
        pad2(eps_in_col, K_pad, 1),     # last dim kept exactly 1 (full-dim rule)
        pad2(b_eff_row, 1, N_pad),
    )
    static = dict(K=K, N=N, tk=tk, tn=tn)
    return arrays, static


# ---------------------------------------------------------------------------
# Forward (jitted; only x padding / output slicing happen per call).
# ---------------------------------------------------------------------------
@functools.partial(jax.jit, static_argnames=("K", "N", "tk", "tn", "tm"))
def noisy_linear_forward(x, wmu_t, wsig_eout_t, eps_in_col, b_eff_row,
                         *, K: int, N: int, tk: int, tn: int, tm: int = 512):
    """x: (B, in_features) -> (B, out_features) with pre-prepared NoisyNet params."""
    B = x.shape[0]
    K_pad, N_pad = wmu_t.shape
    compute_dtype = wmu_t.dtype

    tm = _pick_tile(B, tm, 8)
    B_pad = _round_up(B, tm)

    x_c = x.astype(compute_dtype)
    if (B_pad, K_pad) != x_c.shape:     # static guard: aligned shapes skip the pad
        x_c = jnp.pad(x_c, ((0, B_pad - B), (0, K_pad - K)))

    grid = (B_pad // tm, N_pad // tn, K_pad // tk)

    itemsize = jnp.dtype(compute_dtype).itemsize
    cost = pl.CostEstimate(
        flops=2 * B_pad * K_pad * N_pad,
        transcendentals=0,
        bytes_accessed=(B_pad * K_pad * itemsize          # x
                        + 2 * K_pad * N_pad * itemsize    # wmu + wsig streams
                        + K_pad * itemsize + N_pad * 4    # eps_in col, b_eff row
                        + B_pad * N_pad * 4),             # f32 output
    )

    out = pl.pallas_call(
        noisy_linear_kernel,
        out_shape=jax.ShapeDtypeStruct((B_pad, N_pad), jnp.float32),
        grid_spec=pltpu.PrefetchScalarGridSpec(
            num_scalar_prefetch=0,
            grid=grid,
            in_specs=[
                pl.BlockSpec((tm, tk), lambda i, j, k: (i, k)),   # x tile
                pl.BlockSpec((tk, tn), lambda i, j, k: (k, j)),   # weight_mu^T tile
                pl.BlockSpec((tk, tn), lambda i, j, k: (k, j)),   # weight_sigma^T * eps_out
                pl.BlockSpec((tk, 1),  lambda i, j, k: (k, 0)),   # eps_in column slice
                pl.BlockSpec((1, tn),  lambda i, j, k: (0, j)),   # precomputed b_eff row
            ],
            out_specs=pl.BlockSpec((tm, tn), lambda i, j, k: (i, j)),
        ),
        compiler_params=pltpu.CompilerParams(
            dimension_semantics=("parallel", "parallel", "arbitrary"),
            # Live set ≈ 8 MiB at tm=tn=tk=512 bf16: comfortably inside v7x's
            # 64 MiB and the (raised) scoped budget on v5e/v6e.
            vmem_limit_bytes=32 * 1024 * 1024,
        ),
        cost_estimate=cost,
    )(x_c, wmu_t, wsig_eout_t, eps_in_col, b_eff_row)

    if (B_pad, N_pad) != (B, N):        # static guard: aligned shapes skip the slice
        out = out[:B, :N]
    return out.astype(x.dtype)


# ---------------------------------------------------------------------------
# Deterministic replica of reset_parameters() + reset_noise() (host-side JAX).
# ---------------------------------------------------------------------------
def _scale_noise(key, size):
    # x.sign() * sqrt(|x|), x ~ N(0, 1)   (matches NoisyLinear._scale_noise)
    x = jax.random.normal(key, (size,), dtype=jnp.float32)
    return jnp.sign(x) * jnp.sqrt(jnp.abs(x))


def init_noisy_linear_params(key, in_features, out_features, std_init):
    k_wmu, k_bmu, k_ein, k_eout = jax.random.split(key, 4)
    mu_range = 1.0 / math.sqrt(in_features)
    weight_mu = jax.random.uniform(
        k_wmu, (out_features, in_features), jnp.float32, -mu_range, mu_range)
    weight_sigma = jnp.full(
        (out_features, in_features), std_init / math.sqrt(in_features), jnp.float32)
    bias_mu = jax.random.uniform(
        k_bmu, (out_features,), jnp.float32, -mu_range, mu_range)
    bias_sigma = jnp.full(
        (out_features,), std_init / math.sqrt(out_features), jnp.float32)
    eps_in = _scale_noise(k_ein, in_features)     # weight_epsilon = outer(eps_out, eps_in)
    eps_out = _scale_noise(k_eout, out_features)  # kept factorized (never materialized)
    return weight_mu, weight_sigma, eps_in, eps_out, bias_mu, bias_sigma


def _reference(x, weight_mu, weight_sigma, eps_in, eps_out, bias_mu, bias_sigma):
    # Pure-JAX reference of the exact PyTorch forward.
    weight_epsilon = jnp.outer(eps_out, eps_in)
    w_eff = weight_mu + weight_sigma * weight_epsilon
    b_eff = bias_mu + bias_sigma * eps_out
    return x @ w_eff.T + b_eff


if __name__ == "__main__":
    key = jax.random.PRNGKey(0)
    std_init = 0.5

    # --- Case 1: module-sized small demo, f32 compute (exact parity check) ----
    in1, out1, batch1 = 32, 16, 8
    k_p1, k_x1, key = jax.random.split(key, 3)
    params1 = init_noisy_linear_params(k_p1, in1, out1, std_init)
    x1 = jax.random.normal(k_x1, (batch1, in1), dtype=jnp.float32)

    arrs1, st1 = prepare_noisy_linear_params(*params1, compute_dtype=jnp.float32)
    y1 = jax.block_until_ready(noisy_linear_forward(x1, *arrs1, **st1))
    y1_ref = _reference(x1, *params1)
    assert y1.shape == (batch1, out1)
    assert jnp.allclose(y1, y1_ref, atol=1e-5, rtol=1e-5)

    # --- Case 2: multi-tile grid, bf16 weight streaming (default perf path) ---
    # Exercises the k-axis accumulation, >1 j-programs, and the bf16 cast path.
    in2, out2, batch2 = 256, 384, 8
    k_p2, k_x2 = jax.random.split(key)
    params2 = init_noisy_linear_params(k_p2, in2, out2, std_init)
    x2 = jax.random.normal(k_x2, (batch2, in2), dtype=jnp.float32)

    arrs2, st2 = prepare_noisy_linear_params(*params2, tn=128, tk=128,
                                             compute_dtype=jnp.bfloat16)
    y2 = jax.block_until_ready(noisy_linear_forward(x2, *arrs2, tm=8, **st2))
    y2_ref = _reference(x2, *params2)
    assert y2.shape == (batch2, out2)
    assert jnp.allclose(y2, y2_ref, atol=5e-2, rtol=5e-2)

    print("KERNEL_OK")
</pallas_src>

<mosaic_0001>
module attributes {stable_mosaic.version = 11 : i64} {
  func.func @noisy_linear_kernel(%arg0: i32, %arg1: i32, %arg2: i32, %arg3: memref<8x128xf32, #tpu.memory_space<vmem>>, %arg4: memref<128x128xf32, #tpu.memory_space<vmem>>, %arg5: memref<128x128xf32, #tpu.memory_space<vmem>>, %arg6: memref<128x1xf32, #tpu.memory_space<vmem>>, %arg7: memref<1x128xf32, #tpu.memory_space<vmem>>, %arg8: memref<8x128xf32, #tpu.memory_space<vmem>>) attributes {dimension_semantics = [#tpu.dimension_semantics<parallel>, #tpu.dimension_semantics<parallel>, #tpu.dimension_semantics<arbitrary>], iteration_bounds = array<i64: 1, 1, 1>, scalar_prefetch = 0 : i64, scratch_operands = 0 : i64, tpu.core_type = #tpu.core_type<tc>, window_params = [{transform_indices = @transform_0, window_bounds = array<i64: 8, 128>}, {transform_indices = @transform_1, window_bounds = array<i64: 128, 128>}, {transform_indices = @transform_2, window_bounds = array<i64: 128, 128>}, {transform_indices = @transform_3, window_bounds = array<i64: 128, 1>}, {transform_indices = @transform_4, window_bounds = array<i64: 1, 128>}, {transform_indices = @transform_5, window_bounds = array<i64: 8, 128>}]} {
    %c0_i32 = arith.constant 0 : i32
    %0 = arith.cmpi eq, %arg2, %c0_i32 : i32
    %1 = arith.extui %0 : i1 to i32
    %c0_i32_0 = arith.constant 0 : i32
    %2 = arith.cmpi ne, %1, %c0_i32_0 : i32
    scf.if %2 {
      %cst_12 = arith.constant 0.000000e+00 : f32
      %14 = vector.broadcast %cst_12 : f32 to vector<8x128xf32>
      %c0_13 = arith.constant 0 : index
      %c0_14 = arith.constant 0 : index
      %15 = vector.load %arg7[%c0_13, %c0_14] : memref<1x128xf32, #tpu.memory_space<vmem>>, vector<1x128xf32>
      %16 = vector.broadcast %15 : vector<1x128xf32> to vector<8x128xf32>
      %17 = arith.addf %14, %16 : vector<8x128xf32>
      %c0_15 = arith.constant 0 : index
      %c0_16 = arith.constant 0 : index
      %18 = vector.load %arg8[%c0_15, %c0_16] : memref<8x128xf32, #tpu.memory_space<vmem>>, vector<8x128xf32>
      tpu.vector_store %arg8[%c0_15, %c0_16], %17 {strides = array<i32>} : memref<8x128xf32, #tpu.memory_space<vmem>>, vector<8x128xf32>,
    } else {
    }
    %c0 = arith.constant 0 : index
    %c0_1 = arith.constant 0 : index
    %3 = vector.load %arg4[%c0, %c0_1] : memref<128x128xf32, #tpu.memory_space<vmem>>, vector<128x128xf32>
    %c0_2 = arith.constant 0 : index
    %c0_3 = arith.constant 0 : index
    %4 = vector.load %arg5[%c0_2, %c0_3] : memref<128x128xf32, #tpu.memory_space<vmem>>, vector<128x128xf32>
    %c0_4 = arith.constant 0 : index
    %c0_5 = arith.constant 0 : index
    %5 = vector.load %arg6[%c0_4, %c0_5] : memref<128x1xf32, #tpu.memory_space<vmem>>, vector<128x1xf32>
    %6 = vector.broadcast %5 : vector<128x1xf32> to vector<128x128xf32>
    %7 = arith.mulf %4, %6 : vector<128x128xf32>
    %8 = arith.addf %3, %7 : vector<128x128xf32>
    %c0_6 = arith.constant 0 : index
    %c0_7 = arith.constant 0 : index
    %9 = vector.load %arg8[%c0_6, %c0_7] : memref<8x128xf32, #tpu.memory_space<vmem>>, vector<8x128xf32>
    %c0_8 = arith.constant 0 : index
    %c0_9 = arith.constant 0 : index
    %10 = vector.load %arg3[%c0_8, %c0_9] : memref<8x128xf32, #tpu.memory_space<vmem>>, vector<8x128xf32>
    %cst = arith.constant dense<0.000000e+00> : vector<8x128xf32>
    %11 = tpu.matmul %10, %8, %cst {dimension_numbers = #tpu.dot_dimension_numbers<[1], [0], [0], [1], [0, 0, 1, 1], [], []>} : vector<8x128xf32>, vector<128x128xf32>, vector<8x128xf32> -> vector<8x128xf32>
    %12 = arith.addf %9, %11 : vector<8x128xf32>
    %c0_10 = arith.constant 0 : index
    %c0_11 = arith.constant 0 : index
    %13 = vector.load %arg8[%c0_10, %c0_11] : memref<8x128xf32, #tpu.memory_space<vmem>>, vector<8x128xf32>
    tpu.vector_store %arg8[%c0_10, %c0_11], %12 {strides = array<i32>} : memref<8x128xf32, #tpu.memory_space<vmem>>, vector<8x128xf32>,
    return
  }
  func.func @transform_0(%arg0: i32, %arg1: i32, %arg2: i32) -> (i32, i32) {
    %c0_i32 = arith.constant 0 : i32
    return %arg0, %arg2 : i32, i32
  }
  func.func @transform_1(%arg0: i32, %arg1: i32, %arg2: i32) -> (i32, i32) {
    %c0_i32 = arith.constant 0 : i32
    return %arg2, %arg1 : i32, i32
  }
  func.func @transform_2(%arg0: i32, %arg1: i32, %arg2: i32) -> (i32, i32) {
    %c0_i32 = arith.constant 0 : i32
    return %arg2, %arg1 : i32, i32
  }
  func.func @transform_3(%arg0: i32, %arg1: i32, %arg2: i32) -> (i32, i32) {
    %c0_i32 = arith.constant 0 : i32
    %c0_i32_0 = arith.constant 0 : i32
    return %arg2, %c0_i32 : i32, i32
  }
  func.func @transform_4(%arg0: i32, %arg1: i32, %arg2: i32) -> (i32, i32) {
    %c0_i32 = arith.constant 0 : i32
    %c0_i32_0 = arith.constant 0 : i32
    return %c0_i32, %arg1 : i32, i32
  }
  func.func @transform_5(%arg0: i32, %arg1: i32, %arg2: i32) -> (i32, i32) {
    %c0_i32 = arith.constant 0 : i32
    return %arg0, %arg1 : i32, i32
  }
}

</mosaic_0001>

<llo_original>
// kernel: noisy_linear_forward.1
$region0: #{noisy_linear_forward.1}
  #allocation0 [shape = 'u32[]', space=smem, size = 0x4, offset = 0x4, fixed_abs, tag = 'smem constant byte address 0x4 - core index']
  #allocation1 [shape = 'u32[144,128]{1,0:T(1,128)}', space=vmem, size = 0x12000, scoped, tag = 'internal scratch']
  %s0 = inlined_call_operand.vmem [shape: f32[8,128], index: 0, kind: input, shape index: {}]
  %s1 = inlined_call_operand.vmem [shape: f32[128,128], index: 1, kind: input, shape index: {}]
  %s2 = inlined_call_operand.hbm [shape: f32[128,128], index: 2, kind: input, shape index: {}]
  %s3 = inlined_call_operand.vmem [shape: f32[128,1], index: 3, kind: input, shape index: {}]
  %s4 = inlined_call_operand.vmem [shape: f32[1,128], index: 4, kind: input, shape index: {}]
  %s5 = inlined_call_operand.hbm [shape: f32[8,128], index: 5, kind: output, shape index: {}]
  %s6 = sld [smem:[#allocation0]]
  $region38: #{noisy_linear_forward.1} parent=0
    _
  %s8 = ssub.s32 1, %s6
  %s9 = scalar_select 0, %s8, %s6
  $region1: #{noisy_linear_forward.1} parent=0
    #allocation2 [shape = 'u8[65536]{0}', space=vmem, size = 0x10000, scoped, tag = 'input window, operand 2, single buffered']
    #allocation3 [shape = 's32[1]{0}', space=sflag, size = 0x4, scoped, tag = 'scoped memory for noisy_linear_forward.1']
    #allocation4 [shape = 's32[1]{0}', space=sflag, size = 0x4, scoped, tag = 'scoped memory for noisy_linear_forward.1']
    #allocation5 [shape = 'u8[4096]{0}', space=vmem, size = 0x1000, scoped, tag = 'output window, operand 0, single buffered']
    %10 = vsyncpa [#allocation3], 0
    %11 = vsyncpa [#allocation4], 0
    // Predicated region
    $region2: #{noisy_linear_forward.1} parent=1 // pred_check
      _
    $region3: #{noisy_linear_forward.1} parent=1 // pred_check_branch
      %13 = sbr.rel (0) target = $region5
    $region4: #{noisy_linear_forward.1} parent=1 // pred_region
      _
    $region5: #{noisy_linear_forward.1} parent=1 // pred_fallthru
      _
    // Predicated region
    $region6: #{noisy_linear_forward.1} parent=1 // pred_check
      _
    $region7: #{noisy_linear_forward.1} parent=1 // pred_check_branch
      %15 = sbr.rel (0) target = $region9
    $region8: #{noisy_linear_forward.1} parent=1 // pred_region
      _
    $region9: #{noisy_linear_forward.1} parent=1 // pred_fallthru
      _
    // Predicated region
    $region10: #{noisy_linear_forward.1} parent=1 // pred_check
      _
    $region11: #{noisy_linear_forward.1} parent=1 // pred_check_branch
      %17 = sbr.rel (0) target = $region13
    $region12: #{noisy_linear_forward.1} parent=1 // pred_region
      %s19 = ssub.s32 2048, 2048
      %20 = vsyncadd [#allocation3], %s19
      %s21 = sshll.u32 [#allocation2], 4
      %s22 = int_to_ptr.vmem [resolvable:$true] %s21
      %27 = dma.hbm_to_vmem [thread:$0]  %s2, 2048, %s22, [#allocation3], 128, 128, 8
    $region13: #{noisy_linear_forward.1} parent=1 // pred_fallthru
      _
    // Predicated region
    $region14: #{noisy_linear_forward.1} parent=1 // pred_check
      _
    $region15: #{noisy_linear_forward.1} parent=1 // pred_check_branch
      %29 = sbr.rel (0) target = $region17
    $region16: #{noisy_linear_forward.1} parent=1 // pred_region
      _
    $region17: #{noisy_linear_forward.1} parent=1 // pred_fallthru
      _
    // Predicated region
    $region18: #{noisy_linear_forward.1} parent=1 // pred_check
      _
    $region19: #{noisy_linear_forward.1} parent=1 // pred_check_branch
      %31 = sbr.rel (0) target = $region21
    $region20: #{noisy_linear_forward.1} parent=1 // pred_region
      _
    $region21: #{noisy_linear_forward.1} parent=1 // pred_fallthru
      _
    // Predicated region
    $region22: #{noisy_linear_forward.1} parent=1 // pred_check
      _
    $region23: #{noisy_linear_forward.1} parent=1 // pred_check_branch
      %33 = sbr.rel (0) target = $region25
    $region24: #{noisy_linear_forward.1} parent=1 // pred_region
      %34 = dma.done [#allocation3], 2048
    $region25: #{noisy_linear_forward.1} parent=1 // pred_fallthru
      _
    %p35 = scmp.eq.s32.totalorder 0, 0
    // Predicated region
    $region26: #{noisy_linear_forward.1} parent=1 // pred_check
      %p36 = pneg %p35
    $region27: #{noisy_linear_forward.1} parent=1 // pred_check_branch
      %38 = sbr.rel (%p36) target = $region29
    $region28: #{noisy_linear_forward.1} parent=1 // pred_region
      %v39 = vld [vmem:[%s4] sm:$0x1]
      %v41 = vlaneseq
      %v42 = vshrl.u32 %v41, 7
      %v43 = vsub.s32 0, %v42
      %v44 = vrot.slane %v39, %v43
      %v46 = vadd.f32 %v44, 0.0
      %47 = vst [vmem:[#allocation5] sm:$0xff] %v46
    $region29: #{noisy_linear_forward.1} parent=1 // pred_fallthru
      _
    %v48 = vld [vmem:[%s1] sm:$0xff]
    %v49 = vld [vmem:[%s1 + $0x8] sm:$0xff]
    %v50 = vld [vmem:[%s1 + $0x10] sm:$0xff]
    %v51 = vld [vmem:[%s1 + $0x18] sm:$0xff]
    %v52 = vld [vmem:[%s1 + $0x20] sm:$0xff]
    %v53 = vld [vmem:[%s1 + $0x28] sm:$0xff]
    %v54 = vld [vmem:[%s1 + $0x30] sm:$0xff]
    %v55 = vld [vmem:[%s1 + $0x38] sm:$0xff]
    %v56 = vld [vmem:[%s1 + $0x40] sm:$0xff]
    %v57 = vld [vmem:[%s1 + $0x48] sm:$0xff]
    %v58 = vld [vmem:[%s1 + $0x50] sm:$0xff]
    %v59 = vld [vmem:[%s1 + $0x58] sm:$0xff]
    %v60 = vld [vmem:[%s1 + $0x60] sm:$0xff]
    %v61 = vld [vmem:[%s1 + $0x68] sm:$0xff]
    %v62 = vld [vmem:[%s1 + $0x70] sm:$0xff]
    %v63 = vld [vmem:[%s1 + $0x78] sm:$0xff]
    %v64 = vld [vmem:[#allocation2] sm:$0xff]
    %v65 = vld [vmem:[#allocation2 + $0x8] sm:$0xff]
    %v66 = vld [vmem:[#allocation2 + $0x10] sm:$0xff]
    %v67 = vld [vmem:[#allocation2 + $0x18] sm:$0xff]
    %v68 = vld [vmem:[#allocation2 + $0x20] sm:$0xff]
    %v69 = vld [vmem:[#allocation2 + $0x28] sm:$0xff]
    %v70 = vld [vmem:[#allocation2 + $0x30] sm:$0xff]
    %v71 = vld [vmem:[#allocation2 + $0x38] sm:$0xff]
    %v72 = vld [vmem:[#allocation2 + $0x40] sm:$0xff]
    %v73 = vld [vmem:[#allocation2 + $0x48] sm:$0xff]
    %v74 = vld [vmem:[#allocation2 + $0x50] sm:$0xff]
    %v75 = vld [vmem:[#allocation2 + $0x58] sm:$0xff]
    %v76 = vld [vmem:[#allocation2 + $0x60] sm:$0xff]
    %v77 = vld [vmem:[#allocation2 + $0x68] sm:$0xff]
    %v78 = vld [vmem:[#allocation2 + $0x70] sm:$0xff]
    %v79 = vld [vmem:[#allocation2 + $0x78] sm:$0xff]
    %v80 = vld [vmem:[%s3] sm:$0xff]
    %v81 = vld [vmem:[%s3 + $0x8] sm:$0xff]
    %v82 = vld [vmem:[%s3 + $0x10] sm:$0xff]
    %v83 = vld [vmem:[%s3 + $0x18] sm:$0xff]
    %v84 = vld [vmem:[%s3 + $0x20] sm:$0xff]
    %v85 = vld [vmem:[%s3 + $0x28] sm:$0xff]
    %v86 = vld [vmem:[%s3 + $0x30] sm:$0xff]
    %v87 = vld [vmem:[%s3 + $0x38] sm:$0xff]
    %v88 = vld [vmem:[%s3 + $0x40] sm:$0xff]
    %v89 = vld [vmem:[%s3 + $0x48] sm:$0xff]
    %v90 = vld [vmem:[%s3 + $0x50] sm:$0xff]
    %v91 = vld [vmem:[%s3 + $0x58] sm:$0xff]
    %v92 = vld [vmem:[%s3 + $0x60] sm:$0xff]
    %v93 = vld [vmem:[%s3 + $0x68] sm:$0xff]
    %v94 = vld [vmem:[%s3 + $0x70] sm:$0xff]
    %v95 = vld [vmem:[%s3 + $0x78] sm:$0xff]
    %97 = vset.pattern.permute.xlu0 0
    %98 = vperm.xlu0 %97, %v80
    %v99 = vpop.permute.xlu0 %98
    %102 = vset.pattern.permute.xlu0 0
    %103 = vperm.xlu0 %102, %v81
    %v104 = vpop.permute.xlu0 %103
    %107 = vset.pattern.permute.xlu0 0
    %108 = vperm.xlu0 %107, %v82
    %v109 = vpop.permute.xlu0 %108
    %112 = vset.pattern.permute.xlu0 0
    %113 = vperm.xlu0 %112, %v83
    %v114 = vpop.permute.xlu0 %113
    %117 = vset.pattern.permute.xlu0 0
    %118 = vperm.xlu0 %117, %v84
    %v119 = vpop.permute.xlu0 %118
    %122 = vset.pattern.permute.xlu0 0
    %123 = vperm.xlu0 %122, %v85
    %v124 = vpop.permute.xlu0 %123
    %127 = vset.pattern.permute.xlu0 0
    %128 = vperm.xlu0 %127, %v86
    %v129 = vpop.permute.xlu0 %128
    %132 = vset.pattern.permute.xlu0 0
    %133 = vperm.xlu0 %132, %v87
    %v134 = vpop.permute.xlu0 %133
    %137 = vset.pattern.permute.xlu0 0
    %138 = vperm.xlu0 %137, %v88
    %v139 = vpop.permute.xlu0 %138
    %142 = vset.pattern.permute.xlu0 0
    %143 = vperm.xlu0 %142, %v89
    %v144 = vpop.permute.xlu0 %143
    %147 = vset.pattern.permute.xlu0 0
    %148 = vperm.xlu0 %147, %v90
    %v149 = vpop.permute.xlu0 %148
    %152 = vset.pattern.permute.xlu0 0
    %153 = vperm.xlu0 %152, %v91
    %v154 = vpop.permute.xlu0 %153
    %157 = vset.pattern.permute.xlu0 0
    %158 = vperm.xlu0 %157, %v92
    %v159 = vpop.permute.xlu0 %158
    %162 = vset.pattern.permute.xlu0 0
    %163 = vperm.xlu0 %162, %v93
    %v164 = vpop.permute.xlu0 %163
    %167 = vset.pattern.permute.xlu0 0
    %168 = vperm.xlu0 %167, %v94
    %v169 = vpop.permute.xlu0 %168
    %172 = vset.pattern.permute.xlu0 0
    %173 = vperm.xlu0 %172, %v95
    %v174 = vpop.permute.xlu0 %173
    %v176 = vmul.f32 %v64, %v99
    %v177 = vmul.f32 %v65, %v104
    %v178 = vmul.f32 %v66, %v109
    %v179 = vmul.f32 %v67, %v114
    %v180 = vmul.f32 %v68, %v119
    %v181 = vmul.f32 %v69, %v124
    %v182 = vmul.f32 %v70, %v129
    %v183 = vmul.f32 %v71, %v134
    %v184 = vmul.f32 %v72, %v139
    %v185 = vmul.f32 %v73, %v144
    %v186 = vmul.f32 %v74, %v149
    %v187 = vmul.f32 %v75, %v154
    %v188 = vmul.f32 %v76, %v159
    %v189 = vmul.f32 %v77, %v164
    %v190 = vmul.f32 %v78, %v169
    %v191 = vmul.f32 %v79, %v174
    %v192 = vadd.f32 %v48, %v176
    %v193 = vadd.f32 %v49, %v177
    %v194 = vadd.f32 %v50, %v178
    %v195 = vadd.f32 %v51, %v179
    %v196 = vadd.f32 %v52, %v180
    %v197 = vadd.f32 %v53, %v181
    %v198 = vadd.f32 %v54, %v182
    %v199 = vadd.f32 %v55, %v183
    %v200 = vadd.f32 %v56, %v184
    %v201 = vadd.f32 %v57, %v185
    %v202 = vadd.f32 %v58, %v186
    %v203 = vadd.f32 %v59, %v187
    %v204 = vadd.f32 %v60, %v188
    %v205 = vadd.f32 %v61, %v189
    %v206 = vadd.f32 %v62, %v190
    %v207 = vadd.f32 %v63, %v191
    %v208 = vld [vmem:[#allocation5] sm:$0xff]
    %v209 = vld [vmem:[%s0] sm:$0xff]
    %210 = vmatprep.subr.mxu0 0.0
    %211 = vmatpush1.msra.mxu0 %v192
    %212 = vmatprep.subr.mxu0 0.0
    %213 = vmatpush1.msra.mxu0 %v193
    %214 = vmatprep.subr.mxu0 0.0
    %215 = vmatpush1.msra.mxu0 %v194
    %216 = vmatprep.subr.mxu0 0.0
    %217 = vmatpush1.msra.mxu0 %v195
    %218 = vmatprep.subr.mxu0 0.0
    %219 = vmatpush1.msra.mxu0 %v196
    %220 = vmatprep.subr.mxu0 0.0
    %221 = vmatpush1.msra.mxu0 %v197
    %222 = vmatprep.subr.mxu0 0.0
    %223 = vmatpush1.msra.mxu0 %v198
    %224 = vmatprep.subr.mxu0 0.0
    %225 = vmatpush1.msra.mxu0 %v199
    %226 = vmatprep.subr.mxu0 0.0
    %227 = vmatpush1.msra.mxu0 %v200
    %228 = vmatprep.subr.mxu0 0.0
    %229 = vmatpush1.msra.mxu0 %v201
    %230 = vmatprep.subr.mxu0 0.0
    %231 = vmatpush1.msra.mxu0 %v202
    %232 = vmatprep.subr.mxu0 0.0
    %233 = vmatpush1.msra.mxu0 %v203
    %234 = vmatprep.subr.mxu0 0.0
    %235 = vmatpush1.msra.mxu0 %v204
    %236 = vmatprep.subr.mxu0 0.0
    %237 = vmatpush1.msra.mxu0 %v205
    %238 = vmatprep.subr.mxu0 0.0
    %239 = vmatpush1.msra.mxu0 %v206
    %240 = vmatprep.subr.mxu0 0.0
    %241 = vmatpush1.msra.mxu0 %v207
    %242 = vmatprep.subr.mxu0 0.0
    %243 = vmatpush1.msra.mxu0 0.0
    %244 = vmatprep.subr.mxu0 0.0
    %245 = vmatpush1.msra.mxu0 0.0
    %246 = vmatprep.subr.mxu0 0.0
    %247 = vmatpush1.msra.mxu0 0.0
    %248 = vmatprep.subr.mxu0 0.0
    %249 = vmatpush1.msra.mxu0 0.0
    %250 = vmatprep.subr.mxu0 0.0
    %251 = vmatpush1.msra.mxu0 0.0
    %252 = vmatprep.subr.mxu0 0.0
    %253 = vmatpush1.msra.mxu0 0.0
    %254 = vmatprep.subr.mxu0 0.0
    %255 = vmatpush1.msra.mxu0 0.0
    %256 = vmatprep.subr.mxu0 0.0
    %257 = vmatpush1.msra.mxu0 0.0
    %258 = vmatprep.subr.mxu0 0.0
    %259 = vmatpush1.msra.mxu0 0.0
    %260 = vmatprep.subr.mxu0 0.0
    %261 = vmatpush1.msra.mxu0 0.0
    %262 = vmatprep.subr.mxu0 0.0
    %263 = vmatpush1.msra.mxu0 0.0
    %264 = vmatprep.subr.mxu0 0.0
    %265 = vmatpush1.msra.mxu0 0.0
    %266 = vmatprep.subr.mxu0 0.0
    %267 = vmatpush1.msra.mxu0 0.0
    %268 = vmatprep.subr.mxu0 0.0
    %269 = vmatpush1.msra.mxu0 0.0
    %270 = vmatprep.subr.mxu0 0.0
    %271 = vmatpush1.msra.mxu0 0.0
    %272 = vmatprep.subr.mxu0 0.0
    %273 = vmatpush1.msra.mxu0 0.0
    %274 = vmatprep.mubr.f32.mxu0 0.0
    %275 = vmatmul.mubr.f32.gmra.mrb[0].mxu0 %v209
    %v276 = vpop.f32.mrb[0].mxu0
    %v277 = vadd.f32 0.0, %v276
    %v278 = vpop.f32.mrb[0].mxu0
    %279 = vdwg.mxu0
    %v280 = vadd.f32 %v208, %v277
    %281 = vst [vmem:[#allocation5] sm:$0xff] %v280
    // Predicated region
    $region30: #{noisy_linear_forward.1} parent=1 // pred_check
      _
    $region31: #{noisy_linear_forward.1} parent=1 // pred_check_branch
      %283 = sbr.rel (0) target = $region33
    $region32: #{noisy_linear_forward.1} parent=1 // pred_region
      %s285 = ssub.s32 128, 128
      %286 = vsyncadd [#allocation4], %s285
      %s288 = sshll.u32 [#allocation5], 4
      %s289 = int_to_ptr.vmem [resolvable:$true] %s288
      %291 = dma.vmem_to_hbm [thread:$0]  %s289, 128, %s5, [#allocation4]
    $region33: #{noisy_linear_forward.1} parent=1 // pred_fallthru
      _
    // Predicated region
    $region34: #{noisy_linear_forward.1} parent=1 // pred_check
      _
    $region35: #{noisy_linear_forward.1} parent=1 // pred_check_branch
      %293 = sbr.rel (0) target = $region37
    $region36: #{noisy_linear_forward.1} parent=1 // pred_region
      %294 = dma.done [#allocation4], 128
    $region37: #{noisy_linear_forward.1} parent=1 // pred_fallthru
      _
    %295 = vsyncpa [#allocation3], 1
    %296 = vsyncpa [#allocation4], 1

</llo_original>
